<compile_context>
chip_gen: v7x
topology: tpu7x:2x2x1
jax: 0.10.0
libtpu: 0.0.40
codegen_flags: <defaults>
</compile_context>

<pallas_src>
import jax
import jax.numpy as jnp
from jax.experimental import pallas as pl
from jax.experimental.pallas import tpu as pltpu


def _round_up(a, m):
    return ((a + m - 1) // m) * m


def _attn_kernel_c1(x_ref, w1_ref, b1_ref, w2t_ref, b2_ref, a_ref):
    # x_ref: (TN, L) bf16 | w1_ref: (L, D) bf16 | b1_ref: (1, D) f32
    # w2t_ref: (1, D) f32 | b2_ref: (1,) f32 in SMEM | a_ref: (TN, 1)
    h = jnp.dot(x_ref[...], w1_ref[...], preferred_element_type=jnp.float32)
    h = jnp.tanh(h + b1_ref[...])          # f32 elementwise (VPU + EUP)
    # 1-wide projection: VPU multiply + lane reduce (XLU) — no MXU push for a
    # single output lane; b2 is a scalar from SMEM.
    a = jnp.sum(h * w2t_ref[...], axis=-1, keepdims=True) + b2_ref[0]
    a_ref[...] = a.astype(a_ref.dtype)


def _attn_kernel_general(x_ref, w1_ref, b1_ref, w2_ref, b2_ref, a_ref):
    # General n_classes path: second projection stays on the MXU.
    h = jnp.dot(x_ref[...], w1_ref[...], preferred_element_type=jnp.float32)
    h = jnp.tanh(h + b1_ref[...])
    a = jnp.dot(h.astype(w2_ref.dtype), w2_ref[...],
                preferred_element_type=jnp.float32) + b2_ref[...]
    a_ref[...] = a.astype(a_ref.dtype)


def attn_net_forward(x, w1, b1, w2, b2, *, tn=512):
    """x: (N, L) float32. Returns (A: (N, n_classes) f32, x) like the module."""
    N, L = x.shape
    D = w1.shape[1]
    C = w2.shape[1]

    # Tile size over N: multiple of 16 (bf16 sublane packing), no larger than
    # needed.  TN=512 with L=2048 bf16 is ~2 MiB/tile (x2 double-buffered) +
    # resident W1 — comfortably within the 16 MiB v5e scoped VMEM default and
    # v7x's 64 MiB physical VMEM.  (For v7x one could add
    # pipeline_mode=pl.Buffered(3) on the x spec if DMA remains exposed.)
    tn = max(16, _round_up(min(tn, _round_up(N, 16)), 16))
    n_pad = _round_up(N, tn)
    n_tiles = n_pad // tn
    x_in = jnp.pad(x, ((0, n_pad - N), (0, 0))) if n_pad != N else x

    # bf16 operands for the big matmul; accumulation stays f32.
    x_bf = x_in.astype(jnp.bfloat16)
    w1_bf = w1.astype(jnp.bfloat16)
    b1_2d = b1.reshape(1, D).astype(jnp.float32)

    x_spec = pl.BlockSpec((tn, L), lambda i: (i, 0))
    w1_spec = pl.BlockSpec((L, D), lambda i: (0, 0))      # VMEM-resident
    b1_spec = pl.BlockSpec((1, D), lambda i: (0, 0))
    out_spec = pl.BlockSpec((tn, C), lambda i: (i, 0))

    if C == 1:
        # 1-wide projection on VPU/XLU: pass W2 as a (1, D) f32 row and b2 as
        # an SMEM scalar.
        kernel = _attn_kernel_c1
        w2_arg = w2.reshape(D, 1).T.astype(jnp.float32)    # (1, D)
        b2_arg = b2.reshape(1).astype(jnp.float32)         # (1,) -> SMEM
        extra_specs = [
            pl.BlockSpec((1, D), lambda i: (0, 0)),
            pl.BlockSpec(memory_space=pltpu.MemorySpace.SMEM),
        ]
    else:
        kernel = _attn_kernel_general
        w2_arg = w2.astype(jnp.bfloat16)                   # (D, C)
        b2_arg = b2.reshape(1, C).astype(jnp.float32)
        extra_specs = [
            pl.BlockSpec((D, C), lambda i: (0, 0)),
            pl.BlockSpec((1, C), lambda i: (0, 0)),
        ]

    a_pad = pl.pallas_call(
        kernel,
        out_shape=jax.ShapeDtypeStruct((n_pad, C), jnp.float32),
        grid_spec=pltpu.PrefetchScalarGridSpec(
            num_scalar_prefetch=0,
            grid=(n_tiles,),
            in_specs=[x_spec, w1_spec, b1_spec] + extra_specs,
            out_specs=out_spec,
        ),
        compiler_params=pltpu.CompilerParams(
            dimension_semantics=("parallel",)),  # rows independent -> megacore
    )(x_bf, w1_bf, b1_2d, w2_arg, b2_arg)

    a = a_pad[:N]
    return a, x


if __name__ == "__main__":
    # Small shapes consistent with the module: N patches, L input feat, D
    # hidden, C=n_classes.  N=200 with tn=64 exercises multi-tile + padding.
    N, L, D, C = 200, 256, 128, 1

    key = jax.random.PRNGKey(0)
    kx, kw1, kb1, kw2, kb2 = jax.random.split(key, 5)

    x = jax.random.normal(kx, (N, L), dtype=jnp.float32)
    w1 = jax.random.normal(kw1, (L, D), dtype=jnp.float32) * (1.0 / jnp.sqrt(L))
    b1 = jax.random.normal(kb1, (D,), dtype=jnp.float32) * 0.01
    w2 = jax.random.normal(kw2, (D, C), dtype=jnp.float32) * (1.0 / jnp.sqrt(D))
    b2 = jax.random.normal(kb2, (C,), dtype=jnp.float32) * 0.01

    a, x_out = attn_net_forward(x, w1, b1, w2, b2, tn=64)
    jax.block_until_ready((a, x_out))

    # References: bf16-consistent (same operand casting as the kernel) and
    # full-f32 (loose tolerance for the bf16 operand rounding).
    h_bf = jnp.tanh(
        jnp.dot(x.astype(jnp.bfloat16), w1.astype(jnp.bfloat16),
                preferred_element_type=jnp.float32) + b1)
    a_ref_bf = h_bf @ w2 + b2
    a_ref_f32 = jnp.tanh(x @ w1 + b1) @ w2 + b2

    assert a.shape == (N, C)
    assert x_out.shape == (N, L)
    assert jnp.allclose(a, a_ref_bf, atol=5e-3, rtol=5e-3)
    assert jnp.allclose(a, a_ref_f32, atol=5e-2, rtol=5e-2)
    assert jnp.array_equal(x_out, x)

    print("KERNEL_OK")
</pallas_src>

<mosaic_0001>
module attributes {stable_mosaic.version = 11 : i64} {
  func.func @_attn_kernel_c1(%arg0: i32, %arg1: memref<64x256xbf16, #tpu.memory_space<vmem>>, %arg2: memref<256x128xbf16, #tpu.memory_space<vmem>>, %arg3: memref<1x128xf32, #tpu.memory_space<vmem>>, %arg4: memref<1x128xf32, #tpu.memory_space<vmem>>, %arg5: memref<1xf32, #tpu.memory_space<smem>>, %arg6: memref<64x1xf32, #tpu.memory_space<vmem>>) attributes {dimension_semantics = [#tpu.dimension_semantics<parallel>], iteration_bounds = array<i64: 4>, scalar_prefetch = 0 : i64, scratch_operands = 0 : i64, tpu.core_type = #tpu.core_type<tc>, window_params = [{transform_indices = @transform_0, window_bounds = array<i64: 64, 256>}, {pipeline_mode = #tpu.pipeline_mode<synchronous>, transform_indices = @transform_1, window_bounds = array<i64: 256, 128>}, {pipeline_mode = #tpu.pipeline_mode<synchronous>, transform_indices = @transform_2, window_bounds = array<i64: 1, 128>}, {pipeline_mode = #tpu.pipeline_mode<synchronous>, transform_indices = @transform_3, window_bounds = array<i64: 1, 128>}, {transform_indices = @transform_4, window_bounds = array<i64: 1>}, {transform_indices = @transform_5, window_bounds = array<i64: 64, 1>}]} {
    %c0 = arith.constant 0 : index
    %c0_0 = arith.constant 0 : index
    %0 = vector.load %arg1[%c0, %c0_0] : memref<64x256xbf16, #tpu.memory_space<vmem>>, vector<64x256xbf16>
    %c0_1 = arith.constant 0 : index
    %c0_2 = arith.constant 0 : index
    %1 = vector.load %arg2[%c0_1, %c0_2] : memref<256x128xbf16, #tpu.memory_space<vmem>>, vector<256x128xbf16>
    %cst = arith.constant dense<0.000000e+00> : vector<64x128xf32>
    %2 = tpu.matmul %0, %1, %cst {dimension_numbers = #tpu.dot_dimension_numbers<[1], [0], [0], [1], [0, 0, 1, 1], [], []>} : vector<64x256xbf16>, vector<256x128xbf16>, vector<64x128xf32> -> vector<64x128xf32>
    %c0_3 = arith.constant 0 : index
    %c0_4 = arith.constant 0 : index
    %3 = vector.load %arg3[%c0_3, %c0_4] : memref<1x128xf32, #tpu.memory_space<vmem>>, vector<1x128xf32>
    %4 = vector.broadcast %3 : vector<1x128xf32> to vector<64x128xf32>
    %5 = arith.addf %2, %4 : vector<64x128xf32>
    %6 = math.tanh %5 : vector<64x128xf32>
    %c0_5 = arith.constant 0 : index
    %c0_6 = arith.constant 0 : index
    %7 = vector.load %arg4[%c0_5, %c0_6] : memref<1x128xf32, #tpu.memory_space<vmem>>, vector<1x128xf32>
    %8 = vector.broadcast %7 : vector<1x128xf32> to vector<64x128xf32>
    %9 = arith.mulf %6, %8 : vector<64x128xf32>
    %cst_7 = arith.constant dense<0.000000e+00> : vector<64xf32>
    %10 = vector.multi_reduction <add>, %9, %cst_7 [1] : vector<64x128xf32> to vector<64xf32>
    %11 = vector.shape_cast %10 : vector<64xf32> to vector<64x1xf32>
    %c0_8 = arith.constant 0 : index
    %12 = memref.load %arg5[%c0_8] : memref<1xf32, #tpu.memory_space<smem>>
    %13 = vector.broadcast %12 : f32 to vector<64x1xf32>
    %14 = arith.addf %11, %13 : vector<64x1xf32>
    %c0_9 = arith.constant 0 : index
    %c0_10 = arith.constant 0 : index
    %15 = vector.load %arg6[%c0_9, %c0_10] : memref<64x1xf32, #tpu.memory_space<vmem>>, vector<64x1xf32>
    tpu.vector_store %arg6[%c0_9, %c0_10], %14 {strides = array<i32>} : memref<64x1xf32, #tpu.memory_space<vmem>>, vector<64x1xf32>,
    return
  }
  func.func @transform_0(%arg0: i32) -> (i32, i32) {
    %c0_i32 = arith.constant 0 : i32
    %c0_i32_0 = arith.constant 0 : i32
    return %arg0, %c0_i32 : i32, i32
  }
  func.func @transform_1(%arg0: i32) -> (i32, i32) {
    %c0_i32 = arith.constant 0 : i32
    %c0_i32_0 = arith.constant 0 : i32
    %c0_i32_1 = arith.constant 0 : i32
    return %c0_i32, %c0_i32_0 : i32, i32
  }
  func.func @transform_2(%arg0: i32) -> (i32, i32) {
    %c0_i32 = arith.constant 0 : i32
    %c0_i32_0 = arith.constant 0 : i32
    %c0_i32_1 = arith.constant 0 : i32
    return %c0_i32, %c0_i32_0 : i32, i32
  }
  func.func @transform_3(%arg0: i32) -> (i32, i32) {
    %c0_i32 = arith.constant 0 : i32
    %c0_i32_0 = arith.constant 0 : i32
    %c0_i32_1 = arith.constant 0 : i32
    return %c0_i32, %c0_i32_0 : i32, i32
  }
  func.func @transform_4(%arg0: i32) -> i32 {
    %c0_i32 = arith.constant 0 : i32
    %c0_i32_0 = arith.constant 0 : i32
    return %c0_i32 : i32
  }
  func.func @transform_5(%arg0: i32) -> (i32, i32) {
    %c0_i32 = arith.constant 0 : i32
    %c0_i32_0 = arith.constant 0 : i32
    return %arg0, %c0_i32 : i32, i32
  }
}

</mosaic_0001>

<llo_original>
// kernel: tpu_custom_call.1
$region0: #{tpu_custom_call.1}
  #allocation0 [shape = 'u32[]', space=smem, size = 0x4, offset = 0x4, fixed_abs, tag = 'smem constant byte address 0x4 - core index']
  #allocation1 [shape = 'u32[144,128]{1,0:T(1,128)}', space=vmem, size = 0x12000, scoped, tag = 'internal scratch']
  #allocation2 [shape = 'f32[1]{0:T(128)S(6)}', space=smem, size = 0x200, scoped, tag = 'scoped memory for tpu_custom_call.1']
  %s0 = inlined_call_operand.hbm [shape: bf16[256,256], index: 0, kind: input, shape index: {}]
  %s1 = inlined_call_operand.hbm [shape: bf16[256,128], index: 1, kind: input, shape index: {}]
  %s2 = inlined_call_operand.vmem [shape: f32[1,128], index: 2, kind: input, shape index: {}]
  %s3 = inlined_call_operand.vmem [shape: f32[1,128], index: 3, kind: input, shape index: {}]
  %s4 = inlined_call_operand.<no memory space> [shape: f32[1], index: 4, kind: input, shape index: {}]
  %s5 = inlined_call_operand.vmem [shape: f32[256,1], index: 5, kind: output, shape index: {}]
  %s6 = sld [smem:[#allocation0]]
  $region61: #{tpu_custom_call.1} parent=0
    _
  %s8 = ssub.s32 1, %s6
  %s9 = scalar_select 0, %s8, %s6
  %10 = sst [smem:[#allocation2]] %s4
  $region1: #{tpu_custom_call.1} parent=0
    #allocation3 [shape = 'u8[65536]{0}', space=vmem, size = 0x10000, scoped, tag = 'input window, operand 0']
    #allocation4 [shape = 's32[2]{0}', space=sflag, size = 0x8, scoped, tag = 'scoped memory for tpu_custom_call.1']
    #allocation5 [shape = 'u8[65536]{0}', space=vmem, size = 0x10000, scoped, tag = 'input window, operand 1, single buffered']
    #allocation6 [shape = 's32[1]{0}', space=sflag, size = 0x4, scoped, tag = 'scoped memory for tpu_custom_call.1']
    %11 = vsyncpa [#allocation4], 0
    %s12 = scalar_lea.sflag [#allocation4], 1
    %13 = vsyncpa %s12, 0
    %14 = vsyncpa [#allocation6], 0
    loop: start=0, step=1, limit=6
    $region2: #{tpu_custom_call.1} parent=1 // loop_pre_header
      _
    $region3: #{tpu_custom_call.1} parent=1 // loop_header
      %s16 = sphi 0, %s20
      %p17 = scmp.ge.s32.totalorder %s16, 6
      %s26 = sphi 0, %s28
      %s29 = sphi 0, %s26
      %s30 = sphi 0, %s29
      %s46 = sphi 0, %s30
      %s50 = sphi 0, %s50
      %s52 = sphi 0, %s50
      %s53 = sphi 0, %s52
      %s67 = sphi 0, %s53
      %s71 = sphi 0, %s71
      %s73 = sphi 0, %s71
      %s74 = sphi 0, %s73
      %s88 = sphi 0, %s74
      %s92 = sphi 0, %s92
      %s94 = sphi 0, %s92
      %s95 = sphi 0, %s94
      %s109 = sphi 0, %s95
      %s113 = sphi 0, %s113
      %s115 = sphi 0, %s113
      %s116 = sphi 0, %s115
      %s130 = sphi 0, %s116
      %s136 = sphi 0, %s138
      %s139 = sphi 0, %s136
      %s140 = sphi 0, %s139
      %s156 = sphi 0, %s140
    $region4: #{tpu_custom_call.1} parent=1 // loop_header_branch
      %19 = sbr.rel (%p17) target = $region8
    $region5: #{tpu_custom_call.1} parent=1 // loop_body
      %s21 = ssub.s32 %s16, 1
      %s22 = ssub.s32 %s16, 2
      %s23 = sadd.s32 %s16, 1
      %s24 = ssub.s32 %s16, %s23
      %p25 = scmp.eq.s32.totalorder %s24, 0
      %s27 = sadd.s32 %s26, 1
      %s28 = scalar_select %p25, %s26, %s27
      %p31 = pneg %p25
      %p32 = scmp.eq.s32.totalorder %s16, 3
      %p33 = por %p31, %p32
      %p34 = scmp.ne.s32.totalorder %s26, %s29
      %p35 = scmp.eq.s32.totalorder %s16, 0
      %p36 = por %p34, %p35
      %p37 = scmp.ne.s32.totalorder %s26, %s29
      %p38 = scmp.eq.s32.totalorder %s21, 3
      %p39 = por %p37, %p38
      %p40 = scmp.ne.s32.totalorder %s29, %s30
      %p41 = scmp.eq.s32.totalorder %s21, 0
      %p42 = por %p40, %p41
      %p43 = scmp.ne.s32.totalorder %s29, %s30
      %p44 = scmp.eq.s32.totalorder %s22, 3
      %p45 = por %p43, %p44
      %p47 = scmp.ne.s32.totalorder %s30, %s46
      %p48 = scmp.eq.s32.totalorder %s22, 0
      %p49 = por %p47, %p48
      %s51 = sadd.s32 %s50, 1
      %p54 = scmp.eq.s32.totalorder %s16, 3
      %p55 = scmp.ne.s32.totalorder %s50, %s52
      %p56 = scmp.eq.s32.totalorder %s16, 0
      %p57 = por %p55, %p56
      %p58 = scmp.ne.s32.totalorder %s50, %s52
      %p59 = scmp.eq.s32.totalorder %s21, 3
      %p60 = por %p58, %p59
      %p61 = scmp.ne.s32.totalorder %s52, %s53
      %p62 = scmp.eq.s32.totalorder %s21, 0
      %p63 = por %p61, %p62
      %p64 = scmp.ne.s32.totalorder %s52, %s53
      %p65 = scmp.eq.s32.totalorder %s22, 3
      %p66 = por %p64, %p65
      %p68 = scmp.ne.s32.totalorder %s53, %s67
      %p69 = scmp.eq.s32.totalorder %s22, 0
      %p70 = por %p68, %p69
      %s72 = sadd.s32 %s71, 1
      %p75 = scmp.eq.s32.totalorder %s16, 3
      %p76 = scmp.ne.s32.totalorder %s71, %s73
      %p77 = scmp.eq.s32.totalorder %s16, 0
      %p78 = por %p76, %p77
      %p79 = scmp.ne.s32.totalorder %s71, %s73
      %p80 = scmp.eq.s32.totalorder %s21, 3
      %p81 = por %p79, %p80
      %p82 = scmp.ne.s32.totalorder %s73, %s74
      %p83 = scmp.eq.s32.totalorder %s21, 0
      %p84 = por %p82, %p83
      %p85 = scmp.ne.s32.totalorder %s73, %s74
      %p86 = scmp.eq.s32.totalorder %s22, 3
      %p87 = por %p85, %p86
      %p89 = scmp.ne.s32.totalorder %s74, %s88
      %p90 = scmp.eq.s32.totalorder %s22, 0
      %p91 = por %p89, %p90
      %s93 = sadd.s32 %s92, 1
      %p96 = scmp.eq.s32.totalorder %s16, 3
      %p97 = scmp.ne.s32.totalorder %s92, %s94
      %p98 = scmp.eq.s32.totalorder %s16, 0
      %p99 = por %p97, %p98
      %p100 = scmp.ne.s32.totalorder %s92, %s94
      %p101 = scmp.eq.s32.totalorder %s21, 3
      %p102 = por %p100, %p101
      %p103 = scmp.ne.s32.totalorder %s94, %s95
      %p104 = scmp.eq.s32.totalorder %s21, 0
      %p105 = por %p103, %p104
      %p106 = scmp.ne.s32.totalorder %s94, %s95
      %p107 = scmp.eq.s32.totalorder %s22, 3
      %p108 = por %p106, %p107
      %p110 = scmp.ne.s32.totalorder %s95, %s109
      %p111 = scmp.eq.s32.totalorder %s22, 0
      %p112 = por %p110, %p111
      %s114 = sadd.s32 %s113, 1
      %p117 = scmp.eq.s32.totalorder %s16, 3
      %p118 = scmp.ne.s32.totalorder %s113, %s115
      %p119 = scmp.eq.s32.totalorder %s16, 0
      %p120 = por %p118, %p119
      %p121 = scmp.ne.s32.totalorder %s113, %s115
      %p122 = scmp.eq.s32.totalorder %s21, 3
      %p123 = por %p121, %p122
      %p124 = scmp.ne.s32.totalorder %s115, %s116
      %p125 = scmp.eq.s32.totalorder %s21, 0
      %p126 = por %p124, %p125
      %p127 = scmp.ne.s32.totalorder %s115, %s116
      %p128 = scmp.eq.s32.totalorder %s22, 3
      %p129 = por %p127, %p128
      %p131 = scmp.ne.s32.totalorder %s116, %s130
      %p132 = scmp.eq.s32.totalorder %s22, 0
      %p133 = por %p131, %p132
      %s134 = ssub.s32 %s16, %s23
      %p135 = scmp.eq.s32.totalorder %s134, 0
      %s137 = sadd.s32 %s136, 1
      %s138 = scalar_select %p135, %s136, %s137
      %p141 = pneg %p135
      %p142 = scmp.eq.s32.totalorder %s16, 3
      %p143 = por %p141, %p142
      %p144 = scmp.ne.s32.totalorder %s136, %s139
      %p145 = scmp.eq.s32.totalorder %s16, 0
      %p146 = por %p144, %p145
      %p147 = scmp.ne.s32.totalorder %s136, %s139
      %p148 = scmp.eq.s32.totalorder %s21, 3
      %p149 = por %p147, %p148
      %p150 = scmp.ne.s32.totalorder %s139, %s140
      %p151 = scmp.eq.s32.totalorder %s21, 0
      %p152 = por %p150, %p151
      %p153 = scmp.ne.s32.totalorder %s139, %s140
      %p154 = scmp.eq.s32.totalorder %s22, 3
      %p155 = por %p153, %p154
      %p157 = scmp.ne.s32.totalorder %s140, %s156
      %p158 = scmp.eq.s32.totalorder %s22, 0
      %p159 = por %p157, %p158
      %p160 = scmp.le.s32.totalorder 1, %s16
      %p161 = scmp.lt.s32.totalorder %s16, 5
      %p162 = pnand %p160, %p161
      %p163 = pneg %p162
      // Predicated region
      $region9: #{tpu_custom_call.1} parent=5 // pred_check
        _
      $region10: #{tpu_custom_call.1} parent=5 // pred_check_branch
        %165 = sbr.rel (%p162) target = $region12
      $region11: #{tpu_custom_call.1} parent=5 // pred_region
        %s166 = ssub.s32 %s16, 1
        // Predicated region
        $region13: #{tpu_custom_call.1} parent=11 // pred_check
          %p167 = pneg %p63
        $region14: #{tpu_custom_call.1} parent=11 // pred_check_branch
          %169 = sbr.rel (%p167) target = $region16
        $region15: #{tpu_custom_call.1} parent=11 // pred_region
          %s171 = ssub.s32 2048, 2048
          %172 = vsyncadd [#allocation6], %s171
          %s173 = sshll.u32 [#allocation5], 4
          %s174 = int_to_ptr.vmem [resolvable:$true] %s173
          %179 = dma.hbm_to_vmem [thread:$0]  %s1, 2048, %s174, [#allocation6], 64, 64, 4
        $region16: #{tpu_custom_call.1} parent=11 // pred_fallthru
          _
        // Predicated region
        $region17: #{tpu_custom_call.1} parent=11 // pred_check
          %p180 = pneg %p84
        $region18: #{tpu_custom_call.1} parent=11 // pred_check_branch
          %182 = sbr.rel (%p180) target = $region20
        $region19: #{tpu_custom_call.1} parent=11 // pred_region
          _
        $region20: #{tpu_custom_call.1} parent=11 // pred_fallthru
          _
        // Predicated region
        $region21: #{tpu_custom_call.1} parent=11 // pred_check
          %p183 = pneg %p105
        $region22: #{tpu_custom_call.1} parent=11 // pred_check_branch
          %185 = sbr.rel (%p183) target = $region24
        $region23: #{tpu_custom_call.1} parent=11 // pred_region
          _
        $region24: #{tpu_custom_call.1} parent=11 // pred_fallthru
          _
        // Predicated region
        $region25: #{tpu_custom_call.1} parent=11 // pred_check
          %p186 = pneg %p126
        $region26: #{tpu_custom_call.1} parent=11 // pred_check_branch
          %188 = sbr.rel (%p186) target = $region28
        $region27: #{tpu_custom_call.1} parent=11 // pred_region
          _
        $region28: #{tpu_custom_call.1} parent=11 // pred_fallthru
          _
      $region12: #{tpu_custom_call.1} parent=5 // pred_fallthru
        _
      %p189 = scmp.lt.s32.totalorder %s16, 4
      // Predicated region
      $region29: #{tpu_custom_call.1} parent=5 // pred_check
        %p190 = pneg %p189
      $region30: #{tpu_custom_call.1} parent=5 // pred_check_branch
        %192 = sbr.rel (%p190) target = $region32
      $region31: #{tpu_custom_call.1} parent=5 // pred_region
        // Predicated region
        $region33: #{tpu_custom_call.1} parent=31 // pred_check
          %p193 = pneg %p36
        $region34: #{tpu_custom_call.1} parent=31 // pred_check_branch
          %195 = sbr.rel (%p193) target = $region36
        $region35: #{tpu_custom_call.1} parent=31 // pred_region
          %s196 = sand.u32 %s26, 1
          %s197 = scalar_lea.sflag [#allocation4], %s196
          %s198 = sand.u32 %s26, 1
          %s199 = smul.addr %s198, 64
          %s200 = scalar_lea.vmem [#allocation3], %s199
          %s201 = smul.u32 8, %s16
          %s203 = ssub.s32 1024, 1024
          %204 = vsyncadd %s197, %s203
          %s205 = smul.addr %s201, 2
          %s206 = smul.addr %s205, 64
          %s207 = scalar_lea.hbm %s0, %s206
          %s208 = sshll.u32 %s200, 4
          %s209 = int_to_ptr.vmem [resolvable:$true] %s208
          %214 = dma.hbm_to_vmem [thread:$0]  %s207, 1024, %s209, %s197, 128, 128, 8
        $region36: #{tpu_custom_call.1} parent=31 // pred_fallthru
          _
      $region32: #{tpu_custom_call.1} parent=5 // pred_fallthru
        _
      %p215 = scmp.le.s32.totalorder 1, %s16
      %p216 = scmp.lt.s32.totalorder %s16, 5
      %p217 = pnand %p215, %p216
      %p218 = pneg %p217
      // Predicated region
      $region37: #{tpu_custom_call.1} parent=5 // pred_check
        _
      $region38: #{tpu_custom_call.1} parent=5 // pred_check_branch
        %220 = sbr.rel (%p217) target = $region40
      $region39: #{tpu_custom_call.1} parent=5 // pred_region
        %s221 = ssub.s32 %s16, 1
        %s222 = sand.u32 %s29, 1
        %s223 = scalar_lea.sflag [#allocation4], %s222
        %s224 = sand.u32 %s29, 1
        %s225 = smul.addr %s224, 64
        %s226 = scalar_lea.vmem [#allocation3], %s225
        // Predicated region
        $region41: #{tpu_custom_call.1} parent=39 // pred_check
          %p227 = pneg %p42
        $region42: #{tpu_custom_call.1} parent=39 // pred_check_branch
          %229 = sbr.rel (%p227) target = $region44
        $region43: #{tpu_custom_call.1} parent=39 // pred_region
          %230 = dma.done %s223, 1024
        $region44: #{tpu_custom_call.1} parent=39 // pred_fallthru
          _
        // Predicated region
        $region45: #{tpu_custom_call.1} parent=39 // pred_check
          %p231 = pneg %p63
        $region46: #{tpu_custom_call.1} parent=39 // pred_check_branch
          %233 = sbr.rel (%p231) target = $region48
        $region47: #{tpu_custom_call.1} parent=39 // pred_region
          %234 = dma.done [#allocation6], 2048
        $region48: #{tpu_custom_call.1} parent=39 // pred_fallthru
          _
        %s235 = sand.u32 %s29, 1
        %s236 = scalar_lea.sflag [#allocation4], %s235
        %s237 = sand.u32 %s29, 1
        %s238 = smul.addr %s237, 64
        %s239 = scalar_lea.vmem [#allocation3], %s238
        %p240 = pneg %p42
        %p241 = pneg %p39
        %p242 = pneg %p63
        %p243 = pneg %p60
        %p244 = pneg %p84
        %p245 = pneg %p81
        %p246 = pneg %p105
        %p247 = pneg %p102
        %p248 = pneg %p126
        %p249 = pneg %p123
        %p250 = pneg %p152
        %p251 = pneg %p149
        %s252 = smul.u32 8, %s21
        %p253 = scmp.lt.s32.totalorder %s252, 31
        %s254 = scalar_select %p253, %s252, 31
        %s255 = smul.addr %s254, 8
        %s256 = scalar_lea.vmem %s5, %s255
        %s257 = smul.u32 8, %s21
        %s258 = smul.u32 8, %s21
        %p259 = scmp.lt.s32.totalorder %s258, 31
        %s260 = scalar_select %p259, %s258, 31
        %s261 = smul.addr %s260, 8
        %s262 = scalar_lea.vmem %s5, %s261
        %s263 = smul.u32 8, %s21
        %v265 = vld [vmem:[%s226] sm:$0xff]
        %v266 = vld [vmem:[%s226 + $0x8] sm:$0xff]
        %v267 = vld [vmem:[%s226 + $0x10] sm:$0xff]
        %v268 = vld [vmem:[%s226 + $0x18] sm:$0xff]
        %v269 = vld [vmem:[%s226 + $0x20] sm:$0xff]
        %v270 = vld [vmem:[%s226 + $0x28] sm:$0xff]
        %v271 = vld [vmem:[%s226 + $0x30] sm:$0xff]
        %v272 = vld [vmem:[%s226 + $0x38] sm:$0xff]
        %v273 = vld [vmem:[#allocation5] sm:$0xf]
        %v274 = vld [vmem:[#allocation5 + $0x4] sm:$0xf]
        %v275 = vld [vmem:[#allocation5 + $0x8] sm:$0xf]
        %v276 = vld [vmem:[#allocation5 + $0xc] sm:$0xf]
        %v277 = vld [vmem:[#allocation5 + $0x10] sm:$0xf]
        %v278 = vld [vmem:[#allocation5 + $0x14] sm:$0xf]
        %v279 = vld [vmem:[#allocation5 + $0x18] sm:$0xf]
        %v280 = vld [vmem:[#allocation5 + $0x1c] sm:$0xf]
        %v281 = vld [vmem:[#allocation5 + $0x20] sm:$0xf]
        %v282 = vld [vmem:[#allocation5 + $0x24] sm:$0xf]
        %v283 = vld [vmem:[#allocation5 + $0x28] sm:$0xf]
        %v284 = vld [vmem:[#allocation5 + $0x2c] sm:$0xf]
        %v285 = vld [vmem:[#allocation5 + $0x30] sm:$0xf]
        %v286 = vld [vmem:[#allocation5 + $0x34] sm:$0xf]
        %v287 = vld [vmem:[#allocation5 + $0x38] sm:$0xf]
        %v288 = vld [vmem:[#allocation5 + $0x3c] sm:$0xf]
        %v289 = vld [vmem:[#allocation5 + $0x40] sm:$0xf]
        %v290 = vld [vmem:[#allocation5 + $0x44] sm:$0xf]
        %v291 = vld [vmem:[#allocation5 + $0x48] sm:$0xf]
        %v292 = vld [vmem:[#allocation5 + $0x4c] sm:$0xf]
        %v293 = vld [vmem:[#allocation5 + $0x50] sm:$0xf]
        %v294 = vld [vmem:[#allocation5 + $0x54] sm:$0xf]
        %v295 = vld [vmem:[#allocation5 + $0x58] sm:$0xf]
        %v296 = vld [vmem:[#allocation5 + $0x5c] sm:$0xf]
        %v297 = vld [vmem:[#allocation5 + $0x60] sm:$0xf]
        %v298 = vld [vmem:[#allocation5 + $0x64] sm:$0xf]
        %v299 = vld [vmem:[#allocation5 + $0x68] sm:$0xf]
        %v300 = vld [vmem:[#allocation5 + $0x6c] sm:$0xf]
        %v301 = vld [vmem:[#allocation5 + $0x70] sm:$0xf]
        %v302 = vld [vmem:[#allocation5 + $0x74] sm:$0xf]
        %v303 = vld [vmem:[#allocation5 + $0x78] sm:$0xf]
        %v304 = vld [vmem:[#allocation5 + $0x7c] sm:$0xf]
        %v305 = vld [vmem:[%s2] sm:$0x1]
        %v307 = vlaneseq
        %v308 = vshrl.u32 %v307, 7
        %v309 = vsub.s32 0, %v308
        %v310 = vrot.slane %v305, %v309
        %v320 = vunpack.c.l.b16 %v265
        %v321 = vunpack.c.h.b16 %v265
        %v322 = vunpack.c.l.b16 %v266
        %v323 = vunpack.c.h.b16 %v266
        %v324 = vunpack.c.l.b16 %v267
        %v325 = vunpack.c.h.b16 %v267
        %v326 = vunpack.c.l.b16 %v268
        %v327 = vunpack.c.h.b16 %v268
        %v328 = vunpack.c.l.b16 %v269
        %v329 = vunpack.c.h.b16 %v269
        %v330 = vunpack.c.l.b16 %v270
        %v331 = vunpack.c.h.b16 %v270
        %v332 = vunpack.c.l.b16 %v271
        %v333 = vunpack.c.h.b16 %v271
        %v334 = vunpack.c.l.b16 %v272
        %v335 = vunpack.c.h.b16 %v272
        %v336 = vpack.c.b16 %v322, %v320
        %v337 = vpack.c.b16 %v323, %v321
        %v338 = vpack.c.b16 %v326, %v324
        %v339 = vpack.c.b16 %v327, %v325
        %v340 = vpack.c.b16 %v330, %v328
        %v341 = vpack.c.b16 %v331, %v329
        %v342 = vpack.c.b16 %v334, %v332
        %v343 = vpack.c.b16 %v335, %v333
        %v384 = vunpack.c.l.b16 %v273
        %v385 = vunpack.c.l.b16 %v274
        %v386 = vunpack.c.l.b16 %v275
        %v387 = vunpack.c.l.b16 %v276
        %v388 = vunpack.c.l.b16 %v277
        %v389 = vunpack.c.l.b16 %v278
        %v390 = vunpack.c.l.b16 %v279
        %v391 = vunpack.c.l.b16 %v280
        %v392 = vunpack.c.l.b16 %v281
        %v393 = vunpack.c.l.b16 %v282
        %v394 = vunpack.c.l.b16 %v283
        %v395 = vunpack.c.l.b16 %v284
        %v396 = vunpack.c.l.b16 %v285
        %v397 = vunpack.c.l.b16 %v286
        %v398 = vunpack.c.l.b16 %v287
        %v399 = vunpack.c.l.b16 %v288
        %v400 = vunpack.c.l.b16 %v289
        %v401 = vunpack.c.l.b16 %v290
        %v402 = vunpack.c.l.b16 %v291
        %v403 = vunpack.c.l.b16 %v292
        %v404 = vunpack.c.l.b16 %v293
        %v405 = vunpack.c.l.b16 %v294
        %v406 = vunpack.c.l.b16 %v295
        %v407 = vunpack.c.l.b16 %v296
        %v408 = vunpack.c.l.b16 %v297
        %v409 = vunpack.c.l.b16 %v298
        %v410 = vunpack.c.l.b16 %v299
        %v411 = vunpack.c.l.b16 %v300
        %v412 = vunpack.c.l.b16 %v301
        %v413 = vunpack.c.l.b16 %v302
        %v414 = vunpack.c.l.b16 %v303
        %v415 = vunpack.c.l.b16 %v304
        %v416 = vpack.c.b16 %v385, %v384
        %v417 = vpack.c.b16 %v387, %v386
        %v418 = vpack.c.b16 %v389, %v388
        %v419 = vpack.c.b16 %v391, %v390
        %v420 = vpack.c.b16 %v393, %v392
        %v421 = vpack.c.b16 %v395, %v394
        %v422 = vpack.c.b16 %v397, %v396
        %v423 = vpack.c.b16 %v399, %v398
        %v424 = vpack.c.b16 %v401, %v400
        %v425 = vpack.c.b16 %v403, %v402
        %v426 = vpack.c.b16 %v405, %v404
        %v427 = vpack.c.b16 %v407, %v406
        %v428 = vpack.c.b16 %v409, %v408
        %v429 = vpack.c.b16 %v411, %v410
        %v430 = vpack.c.b16 %v413, %v412
        %v431 = vpack.c.b16 %v415, %v414
        %448 = vmatprep.subr.bf16.mxu0 0
        %449 = vmatpush1.bf16.msra.mxu0 %v416
        %450 = vmatprep.subr.bf16.mxu0 0
        %451 = vmatpush1.bf16.msra.mxu0 %v417
        %452 = vmatprep.subr.bf16.mxu0 0
        %453 = vmatpush1.bf16.msra.mxu0 %v418
        %454 = vmatprep.subr.bf16.mxu0 0
        %455 = vmatpush1.bf16.msra.mxu0 %v419
        %456 = vmatprep.subr.bf16.mxu0 0
        %457 = vmatpush1.bf16.msra.mxu0 %v420
        %458 = vmatprep.subr.bf16.mxu0 0
        %459 = vmatpush1.bf16.msra.mxu0 %v421
        %460 = vmatprep.subr.bf16.mxu0 0
        %461 = vmatpush1.bf16.msra.mxu0 %v422
        %462 = vmatprep.subr.bf16.mxu0 0
        %463 = vmatpush1.bf16.msra.mxu0 %v423
        %464 = vmatprep.subr.bf16.mxu0 0
        %465 = vmatpush1.bf16.msra.mxu0 %v424
        %466 = vmatprep.subr.bf16.mxu0 0
        %467 = vmatpush1.bf16.msra.mxu0 %v425
        %468 = vmatprep.subr.bf16.mxu0 0
        %469 = vmatpush1.bf16.msra.mxu0 %v426
        %470 = vmatprep.subr.bf16.mxu0 0
        %471 = vmatpush1.bf16.msra.mxu0 %v427
        %472 = vmatprep.subr.bf16.mxu0 0
        %473 = vmatpush1.bf16.msra.mxu0 %v428
        %474 = vmatprep.subr.bf16.mxu0 0
        %475 = vmatpush1.bf16.msra.mxu0 %v429
        %476 = vmatprep.subr.bf16.mxu0 0
        %477 = vmatpush1.bf16.msra.mxu0 %v430
        %478 = vmatprep.subr.bf16.mxu0 0
        %479 = vmatpush1.bf16.msra.mxu0 %v431
        %480 = vmatprep.mubr.bf16.mxu0 %v337
        %481 = vmatmul.mubr.bf16.gmra.mrb[0].mxu0 %v336
        %v482 = vpop.f32.mrb[0].mxu0
        %v483 = vadd.f32 %v310, %v482
        %v484 = vpop.f32.mrb[0].mxu0
        %v485 = vpop.f32.mrb[0].mxu0
        %v486 = vadd.f32 %v310, %v485
        %v487 = vpop.f32.mrb[0].mxu0
        %488 = vmatprep.mubr.bf16.mxu0 %v339
        %489 = vmatmul.mubr.bf16.gmra.mrb[0].mxu0 %v338
        %v490 = vpop.f32.mrb[0].mxu0
        %v491 = vadd.f32 %v310, %v490
        %v492 = vpop.f32.mrb[0].mxu0
        %v493 = vpop.f32.mrb[0].mxu0
        %v494 = vadd.f32 %v310, %v493
        %v495 = vpop.f32.mrb[0].mxu0
        %496 = vmatprep.mubr.bf16.mxu0 %v341
        %497 = vmatmul.mubr.bf16.gmra.mrb[0].mxu0 %v340
        %v498 = vpop.f32.mrb[0].mxu0
        %v499 = vadd.f32 %v310, %v498
        %v500 = vpop.f32.mrb[0].mxu0
        %v501 = vpop.f32.mrb[0].mxu0
        %v502 = vadd.f32 %v310, %v501
        %v503 = vpop.f32.mrb[0].mxu0
        %504 = vmatprep.mubr.bf16.mxu0 %v343
        %505 = vmatmul.mubr.bf16.gmra.mrb[0].mxu0 %v342
        %v506 = vpop.f32.mrb[0].mxu0
        %v507 = vadd.f32 %v310, %v506
        %v508 = vpop.f32.mrb[0].mxu0
        %v509 = vpop.f32.mrb[0].mxu0
        %v510 = vadd.f32 %v310, %v509
        %v511 = vpop.f32.mrb[0].mxu0
        %512 = vdwg.mxu0
        %v513 = vtanh.pop %v483
        %v514 = vtanh.pop %v486
        %v515 = vtanh.pop %v491
        %v516 = vtanh.pop %v494
        %v517 = vtanh.pop %v499
        %v518 = vtanh.pop %v502
        %v519 = vtanh.pop %v507
        %v520 = vtanh.pop %v510
        %v521 = vld [vmem:[%s3] sm:$0x1]
        %v523 = vlaneseq
        %v524 = vshrl.u32 %v523, 7
        %v525 = vsub.s32 0, %v524
        %v526 = vrot.slane %v521, %v525
        %v528 = vmul.f32 %v513, %v526
        %v529 = vmul.f32 %v514, %v526
        %v530 = vmul.f32 %v515, %v526
        %v531 = vmul.f32 %v516, %v526
        %v532 = vmul.f32 %v517, %v526
        %v533 = vmul.f32 %v518, %v526
        %v534 = vmul.f32 %v519, %v526
        %v535 = vmul.f32 %v520, %v526
        %536 = vadd.xlane.f32.xlu0 %v528
        %v537 = vpop.xlane.xlu0 %536
        %538 = vadd.xlane.f32.xlu0 %v529
        %v539 = vpop.xlane.xlu0 %538
        %540 = vadd.xlane.f32.xlu0 %v530
        %v541 = vpop.xlane.xlu0 %540
        %542 = vadd.xlane.f32.xlu0 %v531
        %v543 = vpop.xlane.xlu0 %542
        %544 = vadd.xlane.f32.xlu0 %v532
        %v545 = vpop.xlane.xlu0 %544
        %546 = vadd.xlane.f32.xlu0 %v533
        %v547 = vpop.xlane.xlu0 %546
        %548 = vadd.xlane.f32.xlu0 %v534
        %v549 = vpop.xlane.xlu0 %548
        %550 = vadd.xlane.f32.xlu0 %v535
        %v551 = vpop.xlane.xlu0 %550
        %s552 = sld [smem:[#allocation2]]
        %v553 = vstv %s552
        %v554 = vadd.f32 %v537, %v553
        %v555 = vadd.f32 %v539, %v553
        %v556 = vadd.f32 %v541, %v553
        %v557 = vadd.f32 %v543, %v553
        %v558 = vadd.f32 %v545, %v553
        %v559 = vadd.f32 %v547, %v553
        %v560 = vadd.f32 %v549, %v553
        %v561 = vadd.f32 %v551, %v553
        %vm562 = vcmask 7168
        %563 = vst.msk [vmem:[%s262] sm:$0xff] %vm562, %v554
        %564 = vst.msk [vmem:[%s262 + $0x8] sm:$0xff] %vm562, %v555
        %565 = vst.msk [vmem:[%s262 + $0x10] sm:$0xff] %vm562, %v556
        %566 = vst.msk [vmem:[%s262 + $0x18] sm:$0xff] %vm562, %v557
        %567 = vst.msk [vmem:[%s262 + $0x20] sm:$0xff] %vm562, %v558
        %568 = vst.msk [vmem:[%s262 + $0x28] sm:$0xff] %vm562, %v559
        %569 = vst.msk [vmem:[%s262 + $0x30] sm:$0xff] %vm562, %v560
        %570 = vst.msk [vmem:[%s262 + $0x38] sm:$0xff] %vm562, %v561
        %s571 = smul.u32 8, %s21
        %p572 = scmp.lt.s32.totalorder %s571, 31
        %s573 = scalar_select %p572, %s571, 31
        %s574 = smul.addr %s573, 8
        %s575 = scalar_lea.vmem %s5, %s574
        // Predicated region
        $region49: #{tpu_custom_call.1} parent=39 // pred_check
          %p576 = pneg %p149
        $region50: #{tpu_custom_call.1} parent=39 // pred_check_branch
          %578 = sbr.rel (%p576) target = $region52
        $region51: #{tpu_custom_call.1} parent=39 // pred_region
          %s579 = smul.u32 8, %s21
        $region52: #{tpu_custom_call.1} parent=39 // pred_fallthru
          _
      $region40: #{tpu_custom_call.1} parent=5 // pred_fallthru
        _
      %p580 = scmp.le.s32.totalorder 2, %s16
      // Predicated region
      $region53: #{tpu_custom_call.1} parent=5 // pred_check
        %p581 = pneg %p580
      $region54: #{tpu_custom_call.1} parent=5 // pred_check_branch
        %583 = sbr.rel (%p581) target = $region56
      $region55: #{tpu_custom_call.1} parent=5 // pred_region
        %s584 = ssub.s32 %s16, 2
        // Predicated region
        $region57: #{tpu_custom_call.1} parent=55 // pred_check
          %p585 = pneg %p155
        $region58: #{tpu_custom_call.1} parent=55 // pred_check_branch
          %587 = sbr.rel (%p585) target = $region60
        $region59: #{tpu_custom_call.1} parent=55 // pred_region
          %s588 = smul.u32 8, %s22
          %p589 = scmp.lt.s32.totalorder %s588, 31
          %s590 = scalar_select %p589, %s588, 31
          %s591 = smul.addr %s590, 8
          %s592 = scalar_lea.vmem %s5, %s591
        $region60: #{tpu_custom_call.1} parent=55 // pred_fallthru
          _
      $region56: #{tpu_custom_call.1} parent=5 // pred_fallthru
        _
    $region6: #{tpu_custom_call.1} parent=1 // loop_footer
      %s20 = sadd.s32 1, %s16
    $region7: #{tpu_custom_call.1} parent=1 // loop_footer_branch
      %15 = sbr.rel target = $region3
    $region8: #{tpu_custom_call.1} parent=1 // loop_exit
      _
    %593 = vsyncpa [#allocation4], 1
    %s594 = scalar_lea.sflag [#allocation4], 1
    %595 = vsyncpa %s594, 1
    %596 = vsyncpa [#allocation6], 1

</llo_original>
